<compile_context>
chip_gen: v7x
topology: tpu7x:2x2x1
jax: 0.10.0
libtpu: 0.0.40
codegen_flags: <defaults>
</compile_context>

<pallas_src>
import math

import jax
import jax.numpy as jnp
from jax.experimental import pallas as pl
from jax.experimental.pallas import tpu as pltpu

S_SCALE = 30.0
MARGIN = 0.4
NORM_EPS = 1e-12  # F.normalize clamps the norm at eps=1e-12


def add_margin_kernel(x_ref, w_ref, label_ref, o_ref, invw_ref):
    """One (class-tile j, batch-tile i) grid step.

    x_ref     : (TB, D)  compute_dtype -- pre-normalized x (wrapper)
    w_ref     : (TC, D)  compute_dtype -- raw weight tile, resident across i
    label_ref : (TB, 1)  int32
    o_ref     : (TB, TC) out_dtype
    invw_ref  : (1, TC)  f32 VMEM scratch holding s / ||w_c|| for this class tile
    """
    j = pl.program_id(0)          # class tile (outer, "parallel")
    i = pl.program_id(1)          # batch tile (inner, "arbitrary")
    tc = o_ref.shape[1]

    # Per-class s/||w|| scale: the W block index is constant along the inner
    # batch axis, so compute this only on the step that brought the tile in and
    # reuse it from scratch afterwards.  The ones-matmul reduce yields the
    # result directly in (1, TC) lane orientation (no relayout).
    @pl.when(i == 0)
    def _():
        wf = w_ref[...].astype(jnp.float32)                          # (TC, D)
        ones = jnp.ones((8, wf.shape[1]), jnp.float32)
        ssq = jax.lax.dot_general(
            ones, wf * wf,
            dimension_numbers=(((1,), (1,)), ((), ())),
            preferred_element_type=jnp.float32,
        )[0:1, :]                                                    # (1, TC)
        invw_ref[...] = S_SCALE * jax.lax.rsqrt(
            jnp.maximum(ssq, NORM_EPS * NORM_EPS))

    # s*cosine = (x/||x||) @ W_tile^T * (s/||w||), accumulated in f32 on the MXU.
    scaled = jax.lax.dot_general(
        x_ref[...], w_ref[...],
        dimension_numbers=(((1,), (1,)), ((), ())),
        preferred_element_type=jnp.float32,
    ) * invw_ref[...]                                                # (TB, TC)

    # Subtract s*m only on each row's label column; the j*TC tile offset stays
    # on the (TB, 1) side of the compare.
    col = jax.lax.broadcasted_iota(jnp.int32, scaled.shape, 1)
    tgt = label_ref[...] - j * tc                                    # (TB, 1)
    out = jnp.where(col == tgt, scaled - S_SCALE * MARGIN, scaled)
    o_ref[...] = out.astype(o_ref.dtype)


def _default_block_b(B):
    # 256 matches the 256x256 MXU on v6e/v7x; v5e's MXU is 128-wide.
    cap = 128
    try:
        kind = jax.devices()[0].device_kind.lower()
        if ("v6" in kind) or ("v7" in kind) or ("7x" in kind):
            cap = 256
    except Exception:
        pass
    return B if B <= cap else cap


def add_margin_product(x, weight, label, *, block_b=None, block_c=None,
                       compute_dtype=jnp.bfloat16, out_dtype=jnp.float32):
    """x: (B, D), weight: (C, D), label: (B,) int -> (B, C) out_dtype.

    block_b / block_c override the batch / class tile sizes (multiples of
    8 / 128, or the full dimension).  compute_dtype is the streamed/MXU dtype
    (default bf16 on all generations; use jnp.float32 for tight f32 agreement).
    Store `weight` already in compute_dtype to avoid the wrapper cast pass.
    """
    B, D = x.shape
    C, D2 = weight.shape
    assert D == D2, "feature dims of x and weight must match"

    tb = block_b if block_b is not None else _default_block_b(B)
    tc = block_c if block_c is not None else (C if C <= 1024 else 1024)

    # Normalize x once (not once per class-tile step) and cast to compute_dtype
    # so the re-fetched x bytes are halved on the bf16 path.
    x32 = x.astype(jnp.float32)
    x_n = (x32 / jnp.maximum(jnp.linalg.norm(x32, axis=1, keepdims=True),
                             NORM_EPS)).astype(compute_dtype)

    # Only remaining wrapper pass over W (skipped if W is stored in compute_dtype).
    w_stream = weight if weight.dtype == compute_dtype else weight.astype(compute_dtype)

    label2d = label.astype(jnp.int32).reshape(B, 1)

    grid = (pl.cdiv(C, tc), pl.cdiv(B, tb))   # class axis OUTER: W streamed once

    return pl.pallas_call(
        add_margin_kernel,
        out_shape=jax.ShapeDtypeStruct((B, C), out_dtype),
        grid_spec=pltpu.PrefetchScalarGridSpec(
            num_scalar_prefetch=0,
            grid=grid,
            in_specs=[
                pl.BlockSpec((tb, D), lambda j, i: (i, 0)),   # x  (batch tile)
                pl.BlockSpec((tc, D), lambda j, i: (j, 0)),   # W  (resident over i)
                pl.BlockSpec((tb, 1), lambda j, i: (i, 0)),   # labels
            ],
            out_specs=pl.BlockSpec((tb, tc), lambda j, i: (i, j)),
            scratch_shapes=[pltpu.VMEM((1, tc), jnp.float32)],
        ),
        compiler_params=pltpu.CompilerParams(
            dimension_semantics=("parallel", "arbitrary"),
            vmem_limit_bytes=48 * 1024 * 1024,
        ),
    )(x_n, w_stream, label2d)


def reference(x, weight, label):
    xn = x / jnp.maximum(jnp.linalg.norm(x, axis=1, keepdims=True), NORM_EPS)
    wn = weight / jnp.maximum(jnp.linalg.norm(weight, axis=1, keepdims=True), NORM_EPS)
    cosine = xn @ wn.T
    one_hot = jax.nn.one_hot(label, weight.shape[0], dtype=jnp.float32)
    return S_SCALE * (one_hot * (cosine - MARGIN) + (1.0 - one_hot) * cosine)


if __name__ == "__main__":
    B = 16            # batch
    in_features = 32
    out_features = 256

    key = jax.random.PRNGKey(0)
    kx, kw, kl = jax.random.split(key, 3)

    # Deterministic Xavier-uniform init for the weight (as nn.init.xavier_uniform_).
    bound = math.sqrt(6.0 / (in_features + out_features))
    weight = jax.random.uniform(
        kw, (out_features, in_features), jnp.float32, minval=-bound, maxval=bound
    )
    x = jax.random.normal(kx, (B, in_features), jnp.float32)
    label = jax.random.randint(kl, (B,), 0, out_features, dtype=jnp.int32)

    ref = reference(x, weight, label)

    # 1) f32 compute path on a multi-tile grid (2 class tiles x 2 batch tiles):
    #    exercises the class-outer grid, the per-class-tile scratch recompute and
    #    the label-minus-offset margin select.  Tight tolerance vs the f32 ref.
    out_f32 = add_margin_product(x, weight, label, block_b=8, block_c=128,
                                 compute_dtype=jnp.float32)
    out_f32 = jax.block_until_ready(out_f32)
    assert out_f32.shape == (B, out_features)
    err_f32 = float(jnp.max(jnp.abs(out_f32 - ref)))
    assert err_f32 < 1e-4, err_f32

    # 2) Default path (bf16-streamed x/W, f32 accumulation / norms / margin),
    #    auto tile sizes.  bf16 quantization error at the s*cosine scale is
    #    ~1e-2..1e-1, so the f32 tolerance is deliberately NOT reused here.
    out_bf16 = add_margin_product(x, weight, label)
    out_bf16 = jax.block_until_ready(out_bf16)
    assert out_bf16.shape == (B, out_features)
    err_bf16 = float(jnp.max(jnp.abs(out_bf16 - ref)))
    assert err_bf16 < 0.25, err_bf16

    print("KERNEL_OK")
</pallas_src>

<mosaic_0001>
module attributes {stable_mosaic.version = 11 : i64} {
  func.func @add_margin_kernel(%arg0: i32, %arg1: i32, %arg2: memref<8x32xf32, #tpu.memory_space<vmem>>, %arg3: memref<128x32xf32, #tpu.memory_space<vmem>>, %arg4: memref<8x1xi32, #tpu.memory_space<vmem>>, %arg5: memref<8x128xf32, #tpu.memory_space<vmem>>, %arg6: memref<1x128xf32, #tpu.memory_space<vmem>>) attributes {dimension_semantics = [#tpu.dimension_semantics<parallel>, #tpu.dimension_semantics<arbitrary>], iteration_bounds = array<i64: 2, 2>, scalar_prefetch = 0 : i64, scratch_operands = 1 : i64, tpu.core_type = #tpu.core_type<tc>, window_params = [{transform_indices = @transform_0, window_bounds = array<i64: 8, 32>}, {transform_indices = @transform_1, window_bounds = array<i64: 128, 32>}, {transform_indices = @transform_2, window_bounds = array<i64: 8, 1>}, {transform_indices = @transform_3, window_bounds = array<i64: 8, 128>}]} {
    %c0_i32 = arith.constant 0 : i32
    %0 = arith.cmpi eq, %arg1, %c0_i32 : i32
    %1 = arith.extui %0 : i1 to i32
    %c0_i32_0 = arith.constant 0 : i32
    %2 = arith.cmpi ne, %1, %c0_i32_0 : i32
    scf.if %2 {
      %c0_11 = arith.constant 0 : index
      %c0_12 = arith.constant 0 : index
      %20 = vector.load %arg3[%c0_11, %c0_12] : memref<128x32xf32, #tpu.memory_space<vmem>>, vector<128x32xf32>
      %cst_13 = arith.constant 1.000000e+00 : f32
      %21 = vector.broadcast %cst_13 : f32 to vector<8x32xf32>
      %22 = arith.mulf %20, %20 : vector<128x32xf32>
      %cst_14 = arith.constant dense<0.000000e+00> : vector<8x128xf32>
      %23 = tpu.matmul %21, %22, %cst_14 {dimension_numbers = #tpu.dot_dimension_numbers<[1], [1], [0], [0], [0, 0, 1, 0], [], []>} : vector<8x32xf32>, vector<128x32xf32>, vector<8x128xf32> -> vector<8x128xf32>
      %24 = vector.extract_strided_slice %23 {offsets = [0, 0], sizes = [1, 128], strides = [1, 1]} : vector<8x128xf32> to vector<1x128xf32>
      %cst_15 = arith.constant 1.000000e-24 : f32
      %25 = vector.broadcast %cst_15 : f32 to vector<1x128xf32>
      %26 = arith.maximumf %24, %25 : vector<1x128xf32>
      %27 = math.rsqrt %26 : vector<1x128xf32>
      %cst_16 = arith.constant 3.000000e+01 : f32
      %28 = vector.broadcast %cst_16 : f32 to vector<1x128xf32>
      %29 = arith.mulf %28, %27 : vector<1x128xf32>
      %c0_17 = arith.constant 0 : index
      %c0_18 = arith.constant 0 : index
      %30 = vector.load %arg6[%c0_17, %c0_18] : memref<1x128xf32, #tpu.memory_space<vmem>>, vector<1x128xf32>
      tpu.vector_store %arg6[%c0_17, %c0_18], %29 {strides = array<i32>} : memref<1x128xf32, #tpu.memory_space<vmem>>, vector<1x128xf32>,
    } else {
    }
    %c0 = arith.constant 0 : index
    %c0_1 = arith.constant 0 : index
    %3 = vector.load %arg2[%c0, %c0_1] : memref<8x32xf32, #tpu.memory_space<vmem>>, vector<8x32xf32>
    %c0_2 = arith.constant 0 : index
    %c0_3 = arith.constant 0 : index
    %4 = vector.load %arg3[%c0_2, %c0_3] : memref<128x32xf32, #tpu.memory_space<vmem>>, vector<128x32xf32>
    %cst = arith.constant dense<0.000000e+00> : vector<8x128xf32>
    %5 = tpu.matmul %3, %4, %cst {dimension_numbers = #tpu.dot_dimension_numbers<[1], [1], [0], [0], [0, 0, 1, 0], [], []>} : vector<8x32xf32>, vector<128x32xf32>, vector<8x128xf32> -> vector<8x128xf32>
    %c0_4 = arith.constant 0 : index
    %c0_5 = arith.constant 0 : index
    %6 = vector.load %arg6[%c0_4, %c0_5] : memref<1x128xf32, #tpu.memory_space<vmem>>, vector<1x128xf32>
    %7 = vector.broadcast %6 : vector<1x128xf32> to vector<8x128xf32>
    %8 = arith.mulf %5, %7 : vector<8x128xf32>
    %9 = tpu.iota {dimensions = array<i32: 1>} : vector<8x128xi32>
    %c0_6 = arith.constant 0 : index
    %c0_7 = arith.constant 0 : index
    %10 = vector.load %arg4[%c0_6, %c0_7] : memref<8x1xi32, #tpu.memory_space<vmem>>, vector<8x1xi32>
    %c128_i32 = arith.constant 128 : i32
    %11 = arith.muli %arg0, %c128_i32 : i32
    %12 = vector.broadcast %11 : i32 to vector<8x1xi32>
    %13 = arith.subi %10, %12 : vector<8x1xi32>
    %14 = vector.broadcast %13 : vector<8x1xi32> to vector<8x128xi32>
    %15 = arith.cmpi eq, %9, %14 : vector<8x128xi32>
    %cst_8 = arith.constant 1.200000e+01 : f32
    %16 = vector.broadcast %cst_8 : f32 to vector<8x128xf32>
    %17 = arith.subf %8, %16 : vector<8x128xf32>
    %18 = arith.select %15, %17, %8 : vector<8x128xi1>, vector<8x128xf32>
    %c0_9 = arith.constant 0 : index
    %c0_10 = arith.constant 0 : index
    %19 = vector.load %arg5[%c0_9, %c0_10] : memref<8x128xf32, #tpu.memory_space<vmem>>, vector<8x128xf32>
    tpu.vector_store %arg5[%c0_9, %c0_10], %18 {strides = array<i32>} : memref<8x128xf32, #tpu.memory_space<vmem>>, vector<8x128xf32>,
    return
  }
  func.func @transform_0(%arg0: i32, %arg1: i32) -> (i32, i32) {
    %c0_i32 = arith.constant 0 : i32
    %c0_i32_0 = arith.constant 0 : i32
    return %arg1, %c0_i32 : i32, i32
  }
  func.func @transform_1(%arg0: i32, %arg1: i32) -> (i32, i32) {
    %c0_i32 = arith.constant 0 : i32
    %c0_i32_0 = arith.constant 0 : i32
    return %arg0, %c0_i32 : i32, i32
  }
  func.func @transform_2(%arg0: i32, %arg1: i32) -> (i32, i32) {
    %c0_i32 = arith.constant 0 : i32
    %c0_i32_0 = arith.constant 0 : i32
    return %arg1, %c0_i32 : i32, i32
  }
  func.func @transform_3(%arg0: i32, %arg1: i32) -> (i32, i32) {
    %c0_i32 = arith.constant 0 : i32
    return %arg1, %arg0 : i32, i32
  }
}

</mosaic_0001>

<llo_original>
// kernel: tpu_custom_call.1
$region0: #{tpu_custom_call.1}
  #allocation0 [shape = 'u32[]', space=smem, size = 0x4, offset = 0x4, fixed_abs, tag = 'smem constant byte address 0x4 - core index']
  #allocation1 [shape = 'u32[144,128]{1,0:T(1,128)}', space=vmem, size = 0x12000, scoped, tag = 'internal scratch']
  #allocation2 [shape = 'f32[1,128]{1,0:T(1,128)}', space=vmem, size = 0x200, scoped, tag = 'scratch operand']
  %s0 = inlined_call_operand.vmem [shape: f32[16,32], index: 0, kind: input, shape index: {}]
  %s1 = inlined_call_operand.vmem [shape: f32[256,32], index: 1, kind: input, shape index: {}]
  %s2 = inlined_call_operand.vmem [shape: s32[16,1], index: 2, kind: input, shape index: {}]
  %s3 = inlined_call_operand.hbm [shape: f32[16,256], index: 3, kind: output, shape index: {}]
  %s4 = sld [smem:[#allocation0]]
  $region49: #{tpu_custom_call.1} parent=0
    _
  %s6 = ssub.s32 1, %s4
  %s7 = scalar_select 0, %s6, %s4
  $region1: #{tpu_custom_call.1} parent=0
    #allocation3 [shape = 'u8[8192]{0}', space=vmem, size = 0x2000, scoped, tag = 'output window, operand 0']
    #allocation4 [shape = 's32[2]{0}', space=sflag, size = 0x8, scoped, tag = 'scoped memory for tpu_custom_call.1']
    %8 = vsyncpa [#allocation4], 0
    %s9 = scalar_lea.sflag [#allocation4], 1
    %10 = vsyncpa %s9, 0
    loop: start=0, step=1, limit=6
    $region2: #{tpu_custom_call.1} parent=1 // loop_pre_header
      _
    $region3: #{tpu_custom_call.1} parent=1 // loop_header
      %s12 = sphi 0, %s16
      %p13 = scmp.ge.s32.totalorder %s12, 6
      %s19 = sphi 0, %s31
      %s20 = sphi 0, %s27
      %s21 = sphi 0, %s19
      %s22 = sphi 0, %s20
      %s23 = sphi 0, %s21
      %s24 = sphi 0, %s22
      %s34 = sphi 0, %s36
      %s37 = sphi 0, %s34
      %s38 = sphi 0, %s37
      %s54 = sphi 0, %s38
      %s60 = sphi 0, %s62
      %s63 = sphi 0, %s60
      %s64 = sphi 0, %s63
      %s80 = sphi 0, %s64
      %s86 = sphi 0, %s88
      %s89 = sphi 0, %s86
      %s90 = sphi 0, %s89
      %s106 = sphi 0, %s90
      %s114 = sphi 0, %s116
      %s117 = sphi 0, %s114
      %s118 = sphi 0, %s117
      %s134 = sphi 0, %s118
    $region4: #{tpu_custom_call.1} parent=1 // loop_header_branch
      %15 = sbr.rel (%p13) target = $region8
    $region5: #{tpu_custom_call.1} parent=1 // loop_body
      %s17 = ssub.s32 %s12, 1
      %s18 = ssub.s32 %s12, 2
      %s25 = sadd.s32 1, %s20
      %p26 = scmp.ge.s32.totalorder %s25, 2
      %s27 = scalar_select %p26, 0, %s25
      %s28 = sadd.s32 1, %s19
      %s29 = scalar_select %p26, %s28, %s19
      %p30 = scmp.ge.s32.totalorder %s29, 2
      %s31 = scalar_select %p30, 0, %s29
      %s32 = ssub.s32 %s20, %s27
      %p33 = scmp.eq.s32.totalorder %s32, 0
      %s35 = sadd.s32 %s34, 1
      %s36 = scalar_select %p33, %s34, %s35
      %p39 = pneg %p33
      %p40 = scmp.eq.s32.totalorder %s12, 3
      %p41 = por %p39, %p40
      %p42 = scmp.ne.s32.totalorder %s34, %s37
      %p43 = scmp.eq.s32.totalorder %s12, 0
      %p44 = por %p42, %p43
      %p45 = scmp.ne.s32.totalorder %s34, %s37
      %p46 = scmp.eq.s32.totalorder %s17, 3
      %p47 = por %p45, %p46
      %p48 = scmp.ne.s32.totalorder %s37, %s38
      %p49 = scmp.eq.s32.totalorder %s17, 0
      %p50 = por %p48, %p49
      %p51 = scmp.ne.s32.totalorder %s37, %s38
      %p52 = scmp.eq.s32.totalorder %s18, 3
      %p53 = por %p51, %p52
      %p55 = scmp.ne.s32.totalorder %s38, %s54
      %p56 = scmp.eq.s32.totalorder %s18, 0
      %p57 = por %p55, %p56
      %s58 = ssub.s32 %s19, %s31
      %p59 = scmp.eq.s32.totalorder %s58, 0
      %s61 = sadd.s32 %s60, 1
      %s62 = scalar_select %p59, %s60, %s61
      %p65 = pneg %p59
      %p66 = scmp.eq.s32.totalorder %s12, 3
      %p67 = por %p65, %p66
      %p68 = scmp.ne.s32.totalorder %s60, %s63
      %p69 = scmp.eq.s32.totalorder %s12, 0
      %p70 = por %p68, %p69
      %p71 = scmp.ne.s32.totalorder %s60, %s63
      %p72 = scmp.eq.s32.totalorder %s17, 3
      %p73 = por %p71, %p72
      %p74 = scmp.ne.s32.totalorder %s63, %s64
      %p75 = scmp.eq.s32.totalorder %s17, 0
      %p76 = por %p74, %p75
      %p77 = scmp.ne.s32.totalorder %s63, %s64
      %p78 = scmp.eq.s32.totalorder %s18, 3
      %p79 = por %p77, %p78
      %p81 = scmp.ne.s32.totalorder %s64, %s80
      %p82 = scmp.eq.s32.totalorder %s18, 0
      %p83 = por %p81, %p82
      %s84 = ssub.s32 %s20, %s27
      %p85 = scmp.eq.s32.totalorder %s84, 0
      %s87 = sadd.s32 %s86, 1
      %s88 = scalar_select %p85, %s86, %s87
      %p91 = pneg %p85
      %p92 = scmp.eq.s32.totalorder %s12, 3
      %p93 = por %p91, %p92
      %p94 = scmp.ne.s32.totalorder %s86, %s89
      %p95 = scmp.eq.s32.totalorder %s12, 0
      %p96 = por %p94, %p95
      %p97 = scmp.ne.s32.totalorder %s86, %s89
      %p98 = scmp.eq.s32.totalorder %s17, 3
      %p99 = por %p97, %p98
      %p100 = scmp.ne.s32.totalorder %s89, %s90
      %p101 = scmp.eq.s32.totalorder %s17, 0
      %p102 = por %p100, %p101
      %p103 = scmp.ne.s32.totalorder %s89, %s90
      %p104 = scmp.eq.s32.totalorder %s18, 3
      %p105 = por %p103, %p104
      %p107 = scmp.ne.s32.totalorder %s90, %s106
      %p108 = scmp.eq.s32.totalorder %s18, 0
      %p109 = por %p107, %p108
      %s110 = ssub.s32 %s20, %s27
      %s111 = ssub.s32 %s19, %s31
      %s112 = sor.u32 %s110, %s111
      %p113 = scmp.eq.s32.totalorder %s112, 0
      %s115 = sadd.s32 %s114, 1
      %s116 = scalar_select %p113, %s114, %s115
      %p119 = pneg %p113
      %p120 = scmp.eq.s32.totalorder %s12, 3
      %p121 = por %p119, %p120
      %p122 = scmp.ne.s32.totalorder %s114, %s117
      %p123 = scmp.eq.s32.totalorder %s12, 0
      %p124 = por %p122, %p123
      %p125 = scmp.ne.s32.totalorder %s114, %s117
      %p126 = scmp.eq.s32.totalorder %s17, 3
      %p127 = por %p125, %p126
      %p128 = scmp.ne.s32.totalorder %s117, %s118
      %p129 = scmp.eq.s32.totalorder %s17, 0
      %p130 = por %p128, %p129
      %p131 = scmp.ne.s32.totalorder %s117, %s118
      %p132 = scmp.eq.s32.totalorder %s18, 3
      %p133 = por %p131, %p132
      %p135 = scmp.ne.s32.totalorder %s118, %s134
      %p136 = scmp.eq.s32.totalorder %s18, 0
      %p137 = por %p135, %p136
      %p138 = scmp.le.s32.totalorder 1, %s12
      %p139 = scmp.lt.s32.totalorder %s12, 5
      %p140 = pnand %p138, %p139
      %p141 = pneg %p140
      // Predicated region
      $region9: #{tpu_custom_call.1} parent=5 // pred_check
        _
      $region10: #{tpu_custom_call.1} parent=5 // pred_check_branch
        %143 = sbr.rel (%p140) target = $region12
      $region11: #{tpu_custom_call.1} parent=5 // pred_region
        %s144 = ssub.s32 %s12, 1
      $region12: #{tpu_custom_call.1} parent=5 // pred_fallthru
        _
      %p145 = scmp.lt.s32.totalorder %s12, 4
      // Predicated region
      $region13: #{tpu_custom_call.1} parent=5 // pred_check
        %p146 = pneg %p145
      $region14: #{tpu_custom_call.1} parent=5 // pred_check_branch
        %148 = sbr.rel (%p146) target = $region16
      $region15: #{tpu_custom_call.1} parent=5 // pred_region
        // Predicated region
        $region17: #{tpu_custom_call.1} parent=15 // pred_check
          %p149 = pneg %p44
        $region18: #{tpu_custom_call.1} parent=15 // pred_check_branch
          %151 = sbr.rel (%p149) target = $region20
        $region19: #{tpu_custom_call.1} parent=15 // pred_region
          %p152 = scmp.lt.s32.totalorder %s20, 1
          %s153 = scalar_select %p152, %s20, 1
          %s154 = smul.addr %s153, 8
          %s155 = scalar_lea.vmem %s0, %s154
        $region20: #{tpu_custom_call.1} parent=15 // pred_fallthru
          _
        // Predicated region
        $region21: #{tpu_custom_call.1} parent=15 // pred_check
          %p156 = pneg %p70
        $region22: #{tpu_custom_call.1} parent=15 // pred_check_branch
          %158 = sbr.rel (%p156) target = $region24
        $region23: #{tpu_custom_call.1} parent=15 // pred_region
          %s159 = smul.u32 16, %s19
          %p160 = scmp.lt.s32.totalorder %s159, 31
          %s161 = scalar_select %p160, %s159, 31
          %s162 = smul.addr %s161, 8
          %s163 = scalar_lea.vmem %s1, %s162
          %s164 = smul.u32 16, %s19
        $region24: #{tpu_custom_call.1} parent=15 // pred_fallthru
          _
        // Predicated region
        $region25: #{tpu_custom_call.1} parent=15 // pred_check
          %p165 = pneg %p96
        $region26: #{tpu_custom_call.1} parent=15 // pred_check_branch
          %167 = sbr.rel (%p165) target = $region28
        $region27: #{tpu_custom_call.1} parent=15 // pred_region
          %p168 = scmp.lt.s32.totalorder %s20, 1
          %s169 = scalar_select %p168, %s20, 1
          %s170 = smul.addr %s169, 8
          %s171 = scalar_lea.vmem %s2, %s170
        $region28: #{tpu_custom_call.1} parent=15 // pred_fallthru
          _
      $region16: #{tpu_custom_call.1} parent=5 // pred_fallthru
        _
      %p172 = scmp.le.s32.totalorder 1, %s12
      %p173 = scmp.lt.s32.totalorder %s12, 5
      %p174 = pnand %p172, %p173
      %p175 = pneg %p174
      // Predicated region
      $region29: #{tpu_custom_call.1} parent=5 // pred_check
        _
      $region30: #{tpu_custom_call.1} parent=5 // pred_check_branch
        %177 = sbr.rel (%p174) target = $region32
      $region31: #{tpu_custom_call.1} parent=5 // pred_region
        %s178 = ssub.s32 %s12, 1
        %p179 = scmp.lt.s32.totalorder %s22, 1
        %s180 = scalar_select %p179, %s22, 1
        %s181 = smul.addr %s180, 8
        %s182 = scalar_lea.vmem %s0, %s181
        %p183 = pneg %p50
        %p184 = pneg %p47
        %s185 = smul.u32 16, %s21
        %p186 = scmp.lt.s32.totalorder %s185, 31
        %s187 = scalar_select %p186, %s185, 31
        %s188 = smul.addr %s187, 8
        %s189 = scalar_lea.vmem %s1, %s188
        %p190 = pneg %p76
        %p191 = pneg %p73
        %p192 = scmp.lt.s32.totalorder %s22, 1
        %s193 = scalar_select %p192, %s22, 1
        %s194 = smul.addr %s193, 8
        %s195 = scalar_lea.vmem %s2, %s194
        %p196 = pneg %p102
        %p197 = pneg %p99
        %p198 = pneg %p130
        %p199 = pneg %p127
        %s200 = sand.u32 %s117, 1
        %s201 = scalar_lea.sflag [#allocation4], %s200
        %s202 = sand.u32 %s117, 1
        %s203 = smul.addr %s202, 8
        %s204 = scalar_lea.vmem [#allocation3], %s203
        %p205 = scmp.lt.s32.totalorder %s22, 1
        %s206 = scalar_select %p205, %s22, 1
        %s207 = smul.addr %s206, 8
        %s208 = scalar_lea.vmem %s0, %s207
        %s209 = smul.u32 16, %s21
        %p210 = scmp.lt.s32.totalorder %s209, 31
        %s211 = scalar_select %p210, %s209, 31
        %s212 = smul.addr %s211, 8
        %s213 = scalar_lea.vmem %s1, %s212
        %s214 = smul.u32 16, %s21
        %p215 = scmp.lt.s32.totalorder %s22, 1
        %s216 = scalar_select %p215, %s22, 1
        %s217 = smul.addr %s216, 8
        %s218 = scalar_lea.vmem %s2, %s217
        %p219 = scmp.eq.s32.totalorder %s22, 0
        // Predicated region
        $region33: #{tpu_custom_call.1} parent=31 // pred_check
          %p220 = pneg %p219
        $region34: #{tpu_custom_call.1} parent=31 // pred_check_branch
          %222 = sbr.rel (%p220) target = $region36
        $region35: #{tpu_custom_call.1} parent=31 // pred_region
          %v223 = vld [vmem:[%s213] sm:$0xff]
          %v224 = vld [vmem:[%s213 + $0x8] sm:$0xff]
          %v225 = vld [vmem:[%s213 + $0x10] sm:$0xff]
          %v226 = vld [vmem:[%s213 + $0x18] sm:$0xff]
          %v227 = vld [vmem:[%s213 + $0x20] sm:$0xff]
          %v228 = vld [vmem:[%s213 + $0x28] sm:$0xff]
          %v229 = vld [vmem:[%s213 + $0x30] sm:$0xff]
          %v230 = vld [vmem:[%s213 + $0x38] sm:$0xff]
          %v231 = vld [vmem:[%s213 + $0x40] sm:$0xff]
          %v232 = vld [vmem:[%s213 + $0x48] sm:$0xff]
          %v233 = vld [vmem:[%s213 + $0x50] sm:$0xff]
          %v234 = vld [vmem:[%s213 + $0x58] sm:$0xff]
          %v235 = vld [vmem:[%s213 + $0x60] sm:$0xff]
          %v236 = vld [vmem:[%s213 + $0x68] sm:$0xff]
          %v237 = vld [vmem:[%s213 + $0x70] sm:$0xff]
          %v238 = vld [vmem:[%s213 + $0x78] sm:$0xff]
          %v239 = vmul.f32 %v223, %v223
          %v240 = vmul.f32 %v224, %v224
          %v241 = vmul.f32 %v225, %v225
          %v242 = vmul.f32 %v226, %v226
          %v243 = vmul.f32 %v227, %v227
          %v244 = vmul.f32 %v228, %v228
          %v245 = vmul.f32 %v229, %v229
          %v246 = vmul.f32 %v230, %v230
          %v247 = vmul.f32 %v231, %v231
          %v248 = vmul.f32 %v232, %v232
          %v249 = vmul.f32 %v233, %v233
          %v250 = vmul.f32 %v234, %v234
          %v251 = vmul.f32 %v235, %v235
          %v252 = vmul.f32 %v236, %v236
          %v253 = vmul.f32 %v237, %v237
          %v254 = vmul.f32 %v238, %v238
          %vm255 = vcmask 261120
          %v257 = vsel %vm255, 1.0, 0
          %v260 = vsel %vm255, %v239, 0
          %v263 = vsel %vm255, %v240, 0
          %v266 = vsel %vm255, %v241, 0
          %v269 = vsel %vm255, %v242, 0
          %v272 = vsel %vm255, %v243, 0
          %v275 = vsel %vm255, %v244, 0
          %v278 = vsel %vm255, %v245, 0
          %v281 = vsel %vm255, %v246, 0
          %v284 = vsel %vm255, %v247, 0
          %v287 = vsel %vm255, %v248, 0
          %v290 = vsel %vm255, %v249, 0
          %v293 = vsel %vm255, %v250, 0
          %v296 = vsel %vm255, %v251, 0
          %v299 = vsel %vm255, %v252, 0
          %v302 = vsel %vm255, %v253, 0
          %v305 = vsel %vm255, %v254, 0
          %307 = vmatprep.subr.mxu0 0.0
          %308 = vmatpush1.xpose.msra.mxu0 %v260
          %309 = vmatprep.subr.mxu0 0.0
          %310 = vmatpush1.xpose.msra.mxu0 %v263
          %311 = vmatprep.subr.mxu0 0.0
          %312 = vmatpush1.xpose.msra.mxu0 %v266
          %313 = vmatprep.subr.mxu0 0.0
          %314 = vmatpush1.xpose.msra.mxu0 %v269
          %315 = vmatprep.subr.mxu0 0.0
          %316 = vmatpush1.xpose.msra.mxu0 %v272
          %317 = vmatprep.subr.mxu0 0.0
          %318 = vmatpush1.xpose.msra.mxu0 %v275
          %319 = vmatprep.subr.mxu0 0.0
          %320 = vmatpush1.xpose.msra.mxu0 %v278
          %321 = vmatprep.subr.mxu0 0.0
          %322 = vmatpush1.xpose.msra.mxu0 %v281
          %323 = vmatprep.subr.mxu0 0.0
          %324 = vmatpush1.xpose.msra.mxu0 %v284
          %325 = vmatprep.subr.mxu0 0.0
          %326 = vmatpush1.xpose.msra.mxu0 %v287
          %327 = vmatprep.subr.mxu0 0.0
          %328 = vmatpush1.xpose.msra.mxu0 %v290
          %329 = vmatprep.subr.mxu0 0.0
          %330 = vmatpush1.xpose.msra.mxu0 %v293
          %331 = vmatprep.subr.mxu0 0.0
          %332 = vmatpush1.xpose.msra.mxu0 %v296
          %333 = vmatprep.subr.mxu0 0.0
          %334 = vmatpush1.xpose.msra.mxu0 %v299
          %335 = vmatprep.subr.mxu0 0.0
          %336 = vmatpush1.xpose.msra.mxu0 %v302
          %337 = vmatprep.subr.mxu0 0.0
          %338 = vmatpush1.xpose.msra.mxu0 %v305
          %339 = vmatprep.subr.mxu0 0.0
          %340 = vmatpush1.xpose.msra.mxu0 0.0
          %341 = vmatprep.subr.mxu0 0.0
          %342 = vmatpush1.xpose.msra.mxu0 0.0
          %343 = vmatprep.subr.mxu0 0.0
          %344 = vmatpush1.xpose.msra.mxu0 0.0
          %345 = vmatprep.subr.mxu0 0.0
          %346 = vmatpush1.xpose.msra.mxu0 0.0
          %347 = vmatprep.subr.mxu0 0.0
          %348 = vmatpush1.xpose.msra.mxu0 0.0
          %349 = vmatprep.subr.mxu0 0.0
          %350 = vmatpush1.xpose.msra.mxu0 0.0
          %351 = vmatprep.subr.mxu0 0.0
          %352 = vmatpush1.xpose.msra.mxu0 0.0
          %353 = vmatprep.subr.mxu0 0.0
          %354 = vmatpush1.xpose.msra.mxu0 0.0
          %355 = vmatprep.subr.mxu0 0.0
          %356 = vmatpush1.xpose.msra.mxu0 0.0
          %357 = vmatprep.subr.mxu0 0.0
          %358 = vmatpush1.xpose.msra.mxu0 0.0
          %359 = vmatprep.subr.mxu0 0.0
          %360 = vmatpush1.xpose.msra.mxu0 0.0
          %361 = vmatprep.subr.mxu0 0.0
          %362 = vmatpush1.xpose.msra.mxu0 0.0
          %363 = vmatprep.subr.mxu0 0.0
          %364 = vmatpush1.xpose.msra.mxu0 0.0
          %365 = vmatprep.subr.mxu0 0.0
          %366 = vmatpush1.xpose.msra.mxu0 0.0
          %367 = vmatprep.subr.mxu0 0.0
          %368 = vmatpush1.xpose.msra.mxu0 0.0
          %369 = vmatprep.subr.mxu0 0.0
          %370 = vmatpush1.xpose.msra.mxu0 0.0
          %371 = vmatprep.mubr.f32.mxu0 0.0
          %372 = vmatmul.mubr.f32.gmra.mrb[0].mxu0 %v257
          %v373 = vpop.f32.mrb[0].mxu0
          %v374 = vadd.f32 0.0, %v373
          %v375 = vpop.f32.mrb[0].mxu0
          %376 = vdwg.mxu0
          %v377 = vmax.f32 %v374, 1e-24
          %v378 = vrsqrt.pop %v377
          %v379 = vmul.f32 %v378, 30.0
          %380 = vst [vmem:[#allocation2] sm:$0x1] %v379
        $region36: #{tpu_custom_call.1} parent=31 // pred_fallthru
          _
        %v381 = vld [vmem:[%s208] sm:$0xff]
        %v382 = vld [vmem:[%s213] sm:$0xff]
        %v383 = vld [vmem:[%s213 + $0x8] sm:$0xff]
        %v384 = vld [vmem:[%s213 + $0x10] sm:$0xff]
        %v385 = vld [vmem:[%s213 + $0x18] sm:$0xff]
        %v386 = vld [vmem:[%s213 + $0x20] sm:$0xff]
        %v387 = vld [vmem:[%s213 + $0x28] sm:$0xff]
        %v388 = vld [vmem:[%s213 + $0x30] sm:$0xff]
        %v389 = vld [vmem:[%s213 + $0x38] sm:$0xff]
        %v390 = vld [vmem:[%s213 + $0x40] sm:$0xff]
        %v391 = vld [vmem:[%s213 + $0x48] sm:$0xff]
        %v392 = vld [vmem:[%s213 + $0x50] sm:$0xff]
        %v393 = vld [vmem:[%s213 + $0x58] sm:$0xff]
        %v394 = vld [vmem:[%s213 + $0x60] sm:$0xff]
        %v395 = vld [vmem:[%s213 + $0x68] sm:$0xff]
        %v396 = vld [vmem:[%s213 + $0x70] sm:$0xff]
        %v397 = vld [vmem:[%s213 + $0x78] sm:$0xff]
        %vm398 = vcmask 261120
        %v400 = vsel %vm398, %v381, 0
        %v403 = vsel %vm398, %v382, 0
        %v406 = vsel %vm398, %v383, 0
        %v409 = vsel %vm398, %v384, 0
        %v412 = vsel %vm398, %v385, 0
        %v415 = vsel %vm398, %v386, 0
        %v418 = vsel %vm398, %v387, 0
        %v421 = vsel %vm398, %v388, 0
        %v424 = vsel %vm398, %v389, 0
        %v427 = vsel %vm398, %v390, 0
        %v430 = vsel %vm398, %v391, 0
        %v433 = vsel %vm398, %v392, 0
        %v436 = vsel %vm398, %v393, 0
        %v439 = vsel %vm398, %v394, 0
        %v442 = vsel %vm398, %v395, 0
        %v445 = vsel %vm398, %v396, 0
        %v448 = vsel %vm398, %v397, 0
        %450 = vmatprep.subr.mxu0 0.0
        %451 = vmatpush1.xpose.msra.mxu0 %v403
        %452 = vmatprep.subr.mxu0 0.0
        %453 = vmatpush1.xpose.msra.mxu0 %v406
        %454 = vmatprep.subr.mxu0 0.0
        %455 = vmatpush1.xpose.msra.mxu0 %v409
        %456 = vmatprep.subr.mxu0 0.0
        %457 = vmatpush1.xpose.msra.mxu0 %v412
        %458 = vmatprep.subr.mxu0 0.0
        %459 = vmatpush1.xpose.msra.mxu0 %v415
        %460 = vmatprep.subr.mxu0 0.0
        %461 = vmatpush1.xpose.msra.mxu0 %v418
        %462 = vmatprep.subr.mxu0 0.0
        %463 = vmatpush1.xpose.msra.mxu0 %v421
        %464 = vmatprep.subr.mxu0 0.0
        %465 = vmatpush1.xpose.msra.mxu0 %v424
        %466 = vmatprep.subr.mxu0 0.0
        %467 = vmatpush1.xpose.msra.mxu0 %v427
        %468 = vmatprep.subr.mxu0 0.0
        %469 = vmatpush1.xpose.msra.mxu0 %v430
        %470 = vmatprep.subr.mxu0 0.0
        %471 = vmatpush1.xpose.msra.mxu0 %v433
        %472 = vmatprep.subr.mxu0 0.0
        %473 = vmatpush1.xpose.msra.mxu0 %v436
        %474 = vmatprep.subr.mxu0 0.0
        %475 = vmatpush1.xpose.msra.mxu0 %v439
        %476 = vmatprep.subr.mxu0 0.0
        %477 = vmatpush1.xpose.msra.mxu0 %v442
        %478 = vmatprep.subr.mxu0 0.0
        %479 = vmatpush1.xpose.msra.mxu0 %v445
        %480 = vmatprep.subr.mxu0 0.0
        %481 = vmatpush1.xpose.msra.mxu0 %v448
        %482 = vmatprep.subr.mxu0 0.0
        %483 = vmatpush1.xpose.msra.mxu0 0.0
        %484 = vmatprep.subr.mxu0 0.0
        %485 = vmatpush1.xpose.msra.mxu0 0.0
        %486 = vmatprep.subr.mxu0 0.0
        %487 = vmatpush1.xpose.msra.mxu0 0.0
        %488 = vmatprep.subr.mxu0 0.0
        %489 = vmatpush1.xpose.msra.mxu0 0.0
        %490 = vmatprep.subr.mxu0 0.0
        %491 = vmatpush1.xpose.msra.mxu0 0.0
        %492 = vmatprep.subr.mxu0 0.0
        %493 = vmatpush1.xpose.msra.mxu0 0.0
        %494 = vmatprep.subr.mxu0 0.0
        %495 = vmatpush1.xpose.msra.mxu0 0.0
        %496 = vmatprep.subr.mxu0 0.0
        %497 = vmatpush1.xpose.msra.mxu0 0.0
        %498 = vmatprep.subr.mxu0 0.0
        %499 = vmatpush1.xpose.msra.mxu0 0.0
        %500 = vmatprep.subr.mxu0 0.0
        %501 = vmatpush1.xpose.msra.mxu0 0.0
        %502 = vmatprep.subr.mxu0 0.0
        %503 = vmatpush1.xpose.msra.mxu0 0.0
        %504 = vmatprep.subr.mxu0 0.0
        %505 = vmatpush1.xpose.msra.mxu0 0.0
        %506 = vmatprep.subr.mxu0 0.0
        %507 = vmatpush1.xpose.msra.mxu0 0.0
        %508 = vmatprep.subr.mxu0 0.0
        %509 = vmatpush1.xpose.msra.mxu0 0.0
        %510 = vmatprep.subr.mxu0 0.0
        %511 = vmatpush1.xpose.msra.mxu0 0.0
        %512 = vmatprep.subr.mxu0 0.0
        %513 = vmatpush1.xpose.msra.mxu0 0.0
        %514 = vmatprep.mubr.f32.mxu0 0.0
        %515 = vmatmul.mubr.f32.gmra.mrb[0].mxu0 %v400
        %v516 = vpop.f32.mrb[0].mxu0
        %v517 = vadd.f32 0.0, %v516
        %v518 = vpop.f32.mrb[0].mxu0
        %519 = vdwg.mxu0
        %v520 = vld [vmem:[#allocation2] sm:$0x1]
        %v522 = vlaneseq
        %v523 = vshrl.u32 %v522, 7
        %v524 = vsub.s32 0, %v523
        %v525 = vrot.slane %v520, %v524
        %v527 = vmul.f32 %v517, %v525
        %v528 = vlaneseq
        %v529 = vand.u32 %v528, 127
        %v530 = vld [vmem:[%s218] sm:$0xff]
        %s531 = smul.u32 %s21, 128
        %v532 = vstv %s531
        %v533 = vsub.s32 %v530, %v532
        %534 = vset.pattern.permute.xlu0 0
        %535 = vperm.xlu0 %534, %v533
        %v536 = vpop.permute.xlu0 %535
        %vm537 = vcmp.eq.s32.totalorder %v529, %v536
        %v538 = vsub.f32 %v527, 12.0
        %v539 = vsel %vm537, %v538, %v527
        %540 = vst [vmem:[%s204] sm:$0xff] %v539
        %s541 = sand.u32 %s117, 1
        %s542 = scalar_lea.sflag [#allocation4], %s541
        %s543 = sand.u32 %s117, 1
        %s544 = smul.addr %s543, 8
        %s545 = scalar_lea.vmem [#allocation3], %s544
        // Predicated region
        $region37: #{tpu_custom_call.1} parent=31 // pred_check
          %p546 = pneg %p127
        $region38: #{tpu_custom_call.1} parent=31 // pred_check_branch
          %548 = sbr.rel (%p546) target = $region40
        $region39: #{tpu_custom_call.1} parent=31 // pred_region
          %s550 = ssub.s32 128, 128
          %551 = vsyncadd %s542, %s550
          %s552 = smul.addr %s22, 2
          %s553 = sadd.s32 %s21, %s552
          %s554 = smul.addr %s553, 128
          %s555 = scalar_lea.hbm %s3, %s554
          %s557 = sshll.u32 %s545, 4
          %s558 = int_to_ptr.vmem [resolvable:$true] %s557
          %560 = dma.vmem_to_hbm [thread:$0]  %s558, 128, %s555, %s542
        $region40: #{tpu_custom_call.1} parent=31 // pred_fallthru
          _
      $region32: #{tpu_custom_call.1} parent=5 // pred_fallthru
        _
      %p561 = scmp.le.s32.totalorder 2, %s12
      // Predicated region
      $region41: #{tpu_custom_call.1} parent=5 // pred_check
        %p562 = pneg %p561
      $region42: #{tpu_custom_call.1} parent=5 // pred_check_branch
        %564 = sbr.rel (%p562) target = $region44
      $region43: #{tpu_custom_call.1} parent=5 // pred_region
        %s565 = ssub.s32 %s12, 2
        // Predicated region
        $region45: #{tpu_custom_call.1} parent=43 // pred_check
          %p566 = pneg %p133
        $region46: #{tpu_custom_call.1} parent=43 // pred_check_branch
          %568 = sbr.rel (%p566) target = $region48
        $region47: #{tpu_custom_call.1} parent=43 // pred_region
          %s569 = sand.u32 %s118, 1
          %s570 = scalar_lea.sflag [#allocation4], %s569
          %s571 = sand.u32 %s118, 1
          %s572 = smul.addr %s571, 8
          %s573 = scalar_lea.vmem [#allocation3], %s572
          %574 = dma.done %s570, 128
        $region48: #{tpu_custom_call.1} parent=43 // pred_fallthru
          _
      $region44: #{tpu_custom_call.1} parent=5 // pred_fallthru
        _
    $region6: #{tpu_custom_call.1} parent=1 // loop_footer
      %s16 = sadd.s32 1, %s12
    $region7: #{tpu_custom_call.1} parent=1 // loop_footer_branch
      %11 = sbr.rel target = $region3
    $region8: #{tpu_custom_call.1} parent=1 // loop_exit
      _
    %575 = vsyncpa [#allocation4], 1
    %s576 = scalar_lea.sflag [#allocation4], 1
    %577 = vsyncpa %s576, 1

</llo_original>
